<compile_context>
chip_gen: v7x
topology: tpu7x:2x2x1
jax: 0.10.0
libtpu: 0.0.40
codegen_flags: <defaults>
</compile_context>

<pallas_src>
import jax
import jax.numpy as jnp
from jax.experimental import pallas as pl
from jax.experimental.pallas import tpu as pltpu

_LANES = 128
_N_SLOTS = 4                      # max in-flight HBM->HBM DMAs
_CHUNK_BYTES = 4 * 1024 * 1024    # ~4 MiB per DMA chunk


def _make_hbm_copy_kernel(chunk_starts_sizes):
    """Kernel copying x -> o with chunked, overlapped HBM->HBM DMAs.

    chunk_starts_sizes: static tuple of (start_row, n_rows) along axis 0.
    """
    n_chunks = len(chunk_starts_sizes)
    n_slots = min(_N_SLOTS, n_chunks)

    def kernel(x_hbm, o_hbm, sems):
        def desc(idx, slot):
            start, size = chunk_starts_sizes[idx]
            return pltpu.make_async_copy(
                x_hbm.at[pl.ds(start, size)],
                o_hbm.at[pl.ds(start, size)],
                sems.at[slot],
            )

        # Start chunks, keeping at most n_slots DMAs in flight.
        for i in range(n_chunks):
            slot = i % n_slots
            if i >= n_slots:
                desc(i - n_slots, slot).wait()   # free this slot first
            desc(i, slot).start()
        # Drain the remaining outstanding DMAs.
        for i in range(max(0, n_chunks - n_slots), n_chunks):
            desc(i, i % n_slots).wait()

    return kernel, n_slots


def straight_through(x: jax.Array, *, force_materialize: bool = False) -> jax.Array:
    """StraightThrough.forward: identity.

    Default: returns x untouched (no kernel launch, zero HBM traffic — the
    fastest correct answer on every TPU generation).

    force_materialize=True: produce a fresh buffer via a chunked HBM->HBM DMA
    copy kernel (no VMEM round trip).
    """
    if not force_materialize or x.size == 0:
        return x

    total = x.size
    if total % _LANES == 0:
        slab = x.reshape(total // _LANES, _LANES)   # metadata-only reshape
        row_bytes = _LANES * jnp.dtype(x.dtype).itemsize
    else:
        slab = x.reshape(total)                     # 1-D fallback, still DMA-able
        row_bytes = jnp.dtype(x.dtype).itemsize

    rows = slab.shape[0]
    chunk_rows = max(1, min(rows, _CHUNK_BYTES // row_bytes))

    starts_sizes = []
    r = 0
    while r < rows:
        size = min(chunk_rows, rows - r)
        starts_sizes.append((r, size))
        r += size

    kernel, n_slots = _make_hbm_copy_kernel(tuple(starts_sizes))

    out = pl.pallas_call(
        kernel,
        out_shape=jax.ShapeDtypeStruct(slab.shape, x.dtype),
        in_specs=[pl.BlockSpec(memory_space=pl.ANY)],
        out_specs=pl.BlockSpec(memory_space=pl.ANY),
        scratch_shapes=[pltpu.SemaphoreType.DMA((n_slots,))],
    )(slab)

    return out.reshape(x.shape)


if __name__ == "__main__":
    key = jax.random.PRNGKey(0)
    # Small NCHW input consistent with the conv-style module this wraps.
    x = jax.random.normal(key, (2, 4, 16, 16), dtype=jnp.float32)

    # Default/fast path: identity with no kernel launch.
    y_fast = straight_through(x)
    jax.block_until_ready(y_fast)
    assert y_fast.shape == x.shape and y_fast.dtype == x.dtype
    assert bool(jnp.array_equal(y_fast, x))

    # Forced-materialization path: exercises the Pallas HBM->HBM DMA kernel.
    y = straight_through(x, force_materialize=True)
    jax.block_until_ready(y)
    assert y.shape == x.shape and y.dtype == x.dtype
    assert bool(jnp.array_equal(y, x))

    print("KERNEL_OK")
</pallas_src>

<mosaic_0001>
module attributes {stable_mosaic.version = 11 : i64} {
  func.func @kernel(%arg0: memref<16x128xf32, #tpu.memory_space<any>>, %arg1: memref<16x128xf32, #tpu.memory_space<any>>, %arg2: memref<1x!tpu.dma_semaphore, #tpu.memory_space<semaphore_mem>>) attributes {dimension_semantics = [], scalar_prefetch = 0 : i64, scratch_operands = 1 : i64, tpu.core_type = #tpu.core_type<tc>} {
    %c0_i32 = arith.constant 0 : i32
    %c0_i32_0 = arith.constant 0 : i32
    %c0_i32_1 = arith.constant 0 : i32
    %0 = tpu.memref_slice %arg0[%c0_i32_0, %c0_i32_1] : memref<16x128xf32, #tpu.memory_space<any>> -> memref<16x128xf32, #tpu.memory_space<any>>
    %c0_i32_2 = arith.constant 0 : i32
    %c0_i32_3 = arith.constant 0 : i32
    %1 = tpu.memref_slice %arg1[%c0_i32_2, %c0_i32_3] : memref<16x128xf32, #tpu.memory_space<any>> -> memref<16x128xf32, #tpu.memory_space<any>>
    %2 = tpu.memref_slice %arg2[%c0_i32] : memref<1x!tpu.dma_semaphore, #tpu.memory_space<semaphore_mem>> -> memref<1x!tpu.dma_semaphore, #tpu.memory_space<semaphore_mem>>
    %3 = tpu.memref_squeeze %2 : memref<1x!tpu.dma_semaphore, #tpu.memory_space<semaphore_mem>> -> memref<!tpu.dma_semaphore, #tpu.memory_space<semaphore_mem>>
    tpu.enqueue_dma source(%0 : memref<16x128xf32, #tpu.memory_space<any>>) target(%1 : memref<16x128xf32, #tpu.memory_space<any>>) target_semaphore(%3 : memref<!tpu.dma_semaphore, #tpu.memory_space<semaphore_mem>>)
    %c0_i32_4 = arith.constant 0 : i32
    %c0_i32_5 = arith.constant 0 : i32
    %c0_i32_6 = arith.constant 0 : i32
    %4 = tpu.memref_slice %arg0[%c0_i32_5, %c0_i32_6] : memref<16x128xf32, #tpu.memory_space<any>> -> memref<16x128xf32, #tpu.memory_space<any>>
    %c0_i32_7 = arith.constant 0 : i32
    %c0_i32_8 = arith.constant 0 : i32
    %5 = tpu.memref_slice %arg1[%c0_i32_7, %c0_i32_8] : memref<16x128xf32, #tpu.memory_space<any>> -> memref<16x128xf32, #tpu.memory_space<any>>
    %6 = tpu.memref_slice %arg2[%c0_i32_4] : memref<1x!tpu.dma_semaphore, #tpu.memory_space<semaphore_mem>> -> memref<1x!tpu.dma_semaphore, #tpu.memory_space<semaphore_mem>>
    %7 = tpu.memref_squeeze %6 : memref<1x!tpu.dma_semaphore, #tpu.memory_space<semaphore_mem>> -> memref<!tpu.dma_semaphore, #tpu.memory_space<semaphore_mem>>
    tpu.wait_dma2 semaphore(%7 : memref<!tpu.dma_semaphore, #tpu.memory_space<semaphore_mem>>) src(%4 : memref<16x128xf32, #tpu.memory_space<any>>) dst(%5 : memref<16x128xf32, #tpu.memory_space<any>>)
    return
  }
}

</mosaic_0001>

<llo_original>
// kernel: tpu_custom_call.1
$region0: #{tpu_custom_call.1}
  #allocation0 [shape = 'u32[]', space=smem, size = 0x4, offset = 0x4, fixed_abs, tag = 'smem constant byte address 0x4 - core index']
  #allocation1 [shape = 'u32[144,128]{1,0:T(1,128)}', space=vmem, size = 0x12000, scoped, tag = 'internal scratch']
  #allocation2 [shape = 's32[1]{0}', space=sflag, size = 0x4, scoped, tag = 'scratch operand']
  #allocation3 [shape = 's32[]', space=sflag, size = 0x4, offset = 0, fixed_abs, tag = 'sflag constant byte address 0x0 - dummy sync flag']
  #allocation4 [shape = 'u32[0]{0}', space=smem, size = 0, offset = 0, fixed_abs, tag = 'smem constant byte address 0x0 - null']
  %s0 = inlined_call_operand.hbm [shape: f32[16,128], index: 0, kind: input, shape index: {}]
  %s1 = inlined_call_operand.hbm [shape: f32[16,128], index: 1, kind: output, shape index: {}]
  %s2 = sld [smem:[#allocation0]]
  $region2: #{tpu_custom_call.1} parent=0
    _
  %s4 = ssub.s32 1, %s2
  %s5 = scalar_select 0, %s4, %s2
  %s7 = sshll.u32 1, 14
  %s8 = sxor.u32 4294967295, %s7
  %s11 = sshll.u32 3, 24
  %s12 = sxor.u32 4294967295, %s11
  %s13 = sand.u32 0, %s12
  %s15 = sor.u32 %s13, 0
  %18 = dma.general %s0, 256, %s1, [#allocation2], [#allocation3], [#allocation4], %s15, 0
  %s19 = smul.u32 16, 1
  %s20 = sshll.u32 %s19, 4
  %21 = dma.done [#allocation2], %s20
  %22 = vsyncmov [#allocation2]
  %s23 = vpop.sfrf %22
  %p24 = scmp.eq.s32.totalorder %s23, 0
  %p25 = pneg %p24
  %27 = shalt.err (%p25)

</llo_original>
